<compile_context>
chip_gen: v6e
topology: v6e:2x2x1
jax: 0.10.0
libtpu: 0.0.40
codegen_flags: <defaults>
</compile_context>

<pallas_src>
import jax
import jax.numpy as jnp
from jax import lax
from jax.experimental import pallas as pl
from jax.experimental.pallas import tpu as pltpu


# ------------------------------ host-side helpers ------------------------------

def _cdiv(a, b):
    return -(-a // b)


def _vmem_capacity_bytes():
    """Physical per-core VMEM; conservative 64 MiB (v7x) if the query fails."""
    try:
        info = pltpu.get_tpu_info()
        for name in ("vmem_capacity_bytes", "vmem_bytes", "vmem_size_bytes"):
            v = getattr(info, name, None)
            if v:
                return int(v)
    except Exception:
        pass
    return 64 * 1024 * 1024


def _auto_limits(max_block_bytes, vmem_limit_bytes):
    """v5e/v6e (128 MiB VMEM) -> 96 MiB limit / 8 MiB blocks;
    v7x (64 MiB VMEM) -> 48 MiB limit / ~4.8 MiB blocks."""
    cap = _vmem_capacity_bytes()
    if vmem_limit_bytes is None:
        vmem_limit_bytes = min((cap * 3) // 4, 96 * 1024 * 1024)
    if max_block_bytes is None:
        max_block_bytes = min(8 * 1024 * 1024, vmem_limit_bytes // 10)
    return int(max_block_bytes), int(vmem_limit_bytes), cap


def _choose_fold(H, W, target_lanes=128, wp_cap=512):
    """Pick f (a divisor of H) so the folded lane dim f*W is lane-dense.

    (N,C,H,W) -> (N,C,H/f,f*W) is a free row-major reshape; the per-row L2
    norm over the original W becomes a segmented reduction over f segments of
    width W inside the folded lane dim (done on the MXU in the kernel).
    """
    if W >= target_lanes:
        return 1
    divisors = [d for d in range(1, H + 1) if H % d == 0]
    for d in divisors:                       # smallest fold reaching 128 lanes
        if target_lanes <= d * W <= wp_cap:
            return d
    best = 1
    for d in divisors:                       # otherwise: widest fold under cap
        if d * W <= wp_cap:
            best = d
    return best


def _choose_block(N, C, Hf, Wp, itemsize, block_cap, bn_cap, min_steps=4):
    sub = max(8, 32 // max(1, itemsize))     # sublane packing: f32 8, bf16 16, i8 32
    row_bytes = C * Wp * itemsize            # one (folded) H-row, all channels
    img_bytes = row_bytes * Hf

    if img_bytes <= block_cap:
        th = Hf                              # full (folded) image height fits
        bn = max(1, min(N, block_cap // img_bytes, bn_cap))
    else:
        bn = 1
        th = (max(1, block_cap // row_bytes) // sub) * sub
        if th == 0:
            # TODO(synk): one sublane slab already exceeds the block cap; accept
            # the larger block (going smaller would need a C-chunked reduction
            # grid axis with "arbitrary" semantics + a second scaling pass).
            th = sub
        th = min(th, Hf)
        if Hf < sub:
            th = Hf                          # full-extent block is always legal

    # v7x: keep >= min_steps grid steps so both TensorCores get sharded work and
    # the DMA of block i+1 overlaps compute of block i (free on v5e/v6e).
    def nsteps(bn_, th_):
        return _cdiv(N, bn_) * _cdiv(Hf, th_)

    while nsteps(bn, th) < min_steps:
        if bn > 1:
            bn = max(1, bn // 2)
        elif th >= 2 * sub:
            th = max(sub, ((th // 2) // sub) * sub)
        else:
            break
    return bn, th


# ------------------------------- kernel helpers --------------------------------

def _conv1x1(x_ref, w_ref, b_ref):
    """1x1 conv (C -> 1) as scalar-weight channel accumulation, f32 accumulator."""
    bn, num_c, th, wl = x_ref.shape

    def body(c, acc):
        return acc + x_ref[:, c, :, :].astype(jnp.float32) * w_ref[c]

    acc = jnp.zeros((bn, th, wl), jnp.float32)
    if num_c <= 16:                           # full unroll only for small C
        for c in range(num_c):
            acc = body(c, acc)
    else:                                     # capped unroll for large C
        acc = lax.fori_loop(0, num_c, body, acc, unroll=8)
    return acc + b_ref[0]


def _softplus_beta_neg1(x):
    """F.softplus(x, beta=-1) == -softplus(-x), numerically stable."""
    y = -x
    return -(jnp.maximum(y, 0.0) + jnp.log(1.0 + jnp.exp(-jnp.abs(y))))


# ----------------------------------- kernels -----------------------------------

def _attention_kernel_plain(x_ref, w_ref, b_ref, o_ref):
    """x/o: (BN, C, TH, W) VMEM; w: (C,) SMEM; b: (1,) SMEM.  W >= 128 path."""
    bn, num_c, th, wl = x_ref.shape
    att = _softplus_beta_neg1(_conv1x1(x_ref, w_ref, b_ref))        # (BN,TH,W) f32
    sumsq = jnp.sum(att * att, axis=-1, keepdims=True)              # (BN,TH,1)
    inv_norm = lax.rsqrt(jnp.maximum(sumsq, 1e-24))                 # 1/max(||.||,1e-12)
    scale = (1.0 + att * inv_norm).astype(x_ref.dtype)              # (BN,TH,W)

    def write(c):
        o_ref[:, c, :, :] = x_ref[:, c, :, :] * scale

    if num_c <= 16:
        for c in range(num_c):
            write(c)
    else:
        def body(c, carry):
            write(c)
            return carry
        lax.fori_loop(0, num_c, body, 0, unroll=8)


def _attention_kernel_folded(x_ref, w_ref, b_ref, seg_ref, o_ref):
    """Folded path: x/o: (BN, C, TH, Wp=f*W); seg: (Wp, Wp) block-diag 0/1 f32.

    The per-original-W L2 reduction + broadcast is one MXU matmul: (att*att)@S.
    BN is a small static constant (<= 8) so the per-image loop stays cheap.
    """
    bn, num_c, th, wl = x_ref.shape
    att = _softplus_beta_neg1(_conv1x1(x_ref, w_ref, b_ref))        # (BN,TH,Wp) f32
    seg = seg_ref[...]                                              # (Wp,Wp) f32
    for i in range(bn):                                             # static, bn <= 8
        att_i = att[i]                                              # (TH,Wp)
        sumsq = jnp.dot(att_i * att_i, seg,
                        preferred_element_type=jnp.float32)         # segmented sum,
        inv_norm = lax.rsqrt(jnp.maximum(sumsq, 1e-24))             # already broadcast
        scale = (1.0 + att_i * inv_norm).astype(x_ref.dtype)

        if num_c <= 16:
            for c in range(num_c):
                o_ref[i, c, :, :] = x_ref[i, c, :, :] * scale
        else:
            def body(c, carry, i=i, scale=scale):
                o_ref[i, c, :, :] = x_ref[i, c, :, :] * scale
                return carry
            lax.fori_loop(0, num_c, body, 0, unroll=8)


# ---------------------------------- wrapper ------------------------------------

def attention_forward(points, conv_w, conv_b, *, max_block_bytes=None,
                      vmem_limit_bytes=None):
    """points: (N, C, H, W); conv_w: (1, C, 1, 1) or (C,); conv_b: (1,)."""
    N, C, H, W = points.shape
    w = conv_w.reshape(C).astype(jnp.float32)
    b = conv_b.reshape(1).astype(jnp.float32)
    itemsize = points.dtype.itemsize

    block_cap, vmem_limit, cap = _auto_limits(max_block_bytes, vmem_limit_bytes)

    fold = _choose_fold(H, W)
    Hf, Wp = H // fold, fold * W
    x = points.reshape(N, C, Hf, Wp) if fold > 1 else points

    # bn <= 8 on the folded path keeps the in-kernel per-image loop short.
    bn_cap = 8 if fold > 1 else 512
    bn, th = _choose_block(N, C, Hf, Wp, itemsize, block_cap, bn_cap)
    grid = (_cdiv(N, bn), _cdiv(Hf, th))

    blk = pl.BlockSpec((bn, C, th, Wp), lambda n, h: (n, 0, h, 0))
    smem = pl.BlockSpec(memory_space=pltpu.MemorySpace.SMEM)

    # Make sure the pipeline working set (double-buffered in+out blocks, the f32
    # conv/att/scale temporaries and the segment matrix) fits the VMEM limit.
    block_bytes = bn * C * th * Wp * itemsize
    temps_bytes = 3 * bn * th * Wp * 4
    seg_bytes = 2 * Wp * Wp * 4 if fold > 1 else 0
    needed = 4 * block_bytes + temps_bytes + seg_bytes + (2 << 20)
    vmem_limit = max(vmem_limit, min(needed, (cap * 3) // 4))

    params = pltpu.CompilerParams(
        dimension_semantics=("parallel", "parallel"),
        vmem_limit_bytes=int(vmem_limit),
    )
    out_shape = jax.ShapeDtypeStruct((N, C, Hf, Wp), points.dtype)

    if fold > 1:
        lane = jnp.arange(Wp, dtype=jnp.int32)
        seg = (lane[:, None] // W == lane[None, :] // W).astype(jnp.float32)
        out = pl.pallas_call(
            _attention_kernel_folded,
            out_shape=out_shape,
            grid=grid,
            in_specs=[
                blk,                                           # points tile
                smem,                                          # conv weight (C,)
                smem,                                          # conv bias (1,)
                pl.BlockSpec((Wp, Wp), lambda n, h: (0, 0)),   # block-diag ones
            ],
            out_specs=blk,
            compiler_params=params,
        )(x, w, b, seg)
        return out.reshape(N, C, H, W)

    out = pl.pallas_call(
        _attention_kernel_plain,
        out_shape=out_shape,
        grid=grid,
        in_specs=[blk, smem, smem],
        out_specs=blk,
        compiler_params=params,
    )(x, w, b)
    return out


# --------------------------------- reference ------------------------------------

def _reference(points, conv_w, conv_b):
    """Pure-JAX reference (VPU-only reduction; exact f32)."""
    N, C, H, W = points.shape
    w = conv_w.reshape(C).astype(jnp.float32)
    b = conv_b.reshape(()).astype(jnp.float32)
    x = points.astype(jnp.float32)
    conv = jnp.sum(x * w[None, :, None, None], axis=1) + b          # (N, H, W)
    att = -jax.nn.softplus(-conv)                                   # softplus, beta=-1
    norm = jnp.sqrt(jnp.sum(att * att, axis=-1, keepdims=True))
    att_n = att / jnp.maximum(norm, 1e-12)
    return (x + x * att_n[:, None, :, :]).astype(points.dtype)


# ----------------------------------- tests --------------------------------------

if __name__ == "__main__":
    key = jax.random.PRNGKey(0)
    keys = jax.random.split(key, 9)

    # --- test 1: module-sized small input -> folded lane-dense path (W=16) ------
    N, C, H, W = 2, 4, 16, 16
    points = jax.random.normal(keys[0], (N, C, H, W), dtype=jnp.float32)
    conv_w = 0.5 * jax.random.normal(keys[1], (1, C, 1, 1), dtype=jnp.float32)
    conv_b = 0.1 * jax.random.normal(keys[2], (1,), dtype=jnp.float32)
    gamma = jnp.zeros((1,), dtype=jnp.float32)   # parameter exists, unused in forward

    out = jax.block_until_ready(attention_forward(points, conv_w, conv_b))
    ref = _reference(points, conv_w, conv_b)
    assert out.shape == (N, C, H, W)
    assert jnp.allclose(out, ref, rtol=1e-5, atol=1e-5), "mismatch vs reference (test 1)"

    # --- test 2: W>=128 plain path with forced H-tiling (incl. a partial tile) ---
    N2, C2, H2, W2 = 2, 8, 48, 128
    pts2 = jax.random.normal(keys[3], (N2, C2, H2, W2), dtype=jnp.float32)
    conv_w2 = 0.5 * jax.random.normal(keys[4], (1, C2, 1, 1), dtype=jnp.float32)
    conv_b2 = 0.1 * jax.random.normal(keys[5], (1,), dtype=jnp.float32)
    out2 = jax.block_until_ready(
        attention_forward(pts2, conv_w2, conv_b2, max_block_bytes=128 * 1024))
    ref2 = _reference(pts2, conv_w2, conv_b2)
    assert jnp.allclose(out2, ref2, rtol=1e-5, atol=1e-5), "mismatch vs reference (test 2)"

    # --- test 3: folded path with batched N per block (exercises bn > 1) --------
    N3, C3, H3, W3 = 16, 4, 16, 16
    pts3 = jax.random.normal(keys[6], (N3, C3, H3, W3), dtype=jnp.float32)
    conv_w3 = 0.5 * jax.random.normal(keys[7], (1, C3, 1, 1), dtype=jnp.float32)
    conv_b3 = 0.1 * jax.random.normal(keys[8], (1,), dtype=jnp.float32)
    out3 = jax.block_until_ready(attention_forward(pts3, conv_w3, conv_b3))
    ref3 = _reference(pts3, conv_w3, conv_b3)
    assert jnp.allclose(out3, ref3, rtol=1e-5, atol=1e-5), "mismatch vs reference (test 3)"

    print("KERNEL_OK")
</pallas_src>

<mosaic_0001>
module attributes {stable_mosaic.version = 11 : i64} {
  func.func @_attention_kernel_folded(%arg0: i32, %arg1: i32, %arg2: memref<1x4x2x128xf32, #tpu.memory_space<vmem>>, %arg3: memref<4xf32, #tpu.memory_space<smem>>, %arg4: memref<1xf32, #tpu.memory_space<smem>>, %arg5: memref<128x128xf32, #tpu.memory_space<vmem>>, %arg6: memref<1x4x2x128xf32, #tpu.memory_space<vmem>>) attributes {dimension_semantics = [#tpu.dimension_semantics<parallel>, #tpu.dimension_semantics<parallel>], iteration_bounds = array<i64: 2, 1>, scalar_prefetch = 0 : i64, scratch_operands = 0 : i64, tpu.core_type = #tpu.core_type<tc>, window_params = [{transform_indices = @transform_0, window_bounds = array<i64: 1, 4, 2, 128>}, {transform_indices = @transform_1, window_bounds = array<i64: 4>}, {transform_indices = @transform_2, window_bounds = array<i64: 1>}, {pipeline_mode = #tpu.pipeline_mode<synchronous>, transform_indices = @transform_3, window_bounds = array<i64: 128, 128>}, {transform_indices = @transform_4, window_bounds = array<i64: 1, 4, 2, 128>}]} {
    %cst = arith.constant 0.000000e+00 : f32
    %0 = vector.broadcast %cst : f32 to vector<1x2x128xf32>
    %c0 = arith.constant 0 : index
    %c0_0 = arith.constant 0 : index
    %c0_1 = arith.constant 0 : index
    %c0_2 = arith.constant 0 : index
    %1 = vector.load %arg2[%c0, %c0_0, %c0_1, %c0_2] : memref<1x4x2x128xf32, #tpu.memory_space<vmem>>, vector<1x1x2x128xf32>
    %2 = vector.shape_cast %1 : vector<1x1x2x128xf32> to vector<1x2x128xf32>
    %c0_3 = arith.constant 0 : index
    %3 = memref.load %arg3[%c0_3] : memref<4xf32, #tpu.memory_space<smem>>
    %4 = vector.broadcast %3 : f32 to vector<1x2x128xf32>
    %5 = arith.mulf %2, %4 : vector<1x2x128xf32>
    %6 = arith.addf %0, %5 : vector<1x2x128xf32>
    %c0_4 = arith.constant 0 : index
    %c1 = arith.constant 1 : index
    %c0_5 = arith.constant 0 : index
    %c0_6 = arith.constant 0 : index
    %7 = vector.load %arg2[%c0_4, %c1, %c0_5, %c0_6] : memref<1x4x2x128xf32, #tpu.memory_space<vmem>>, vector<1x1x2x128xf32>
    %8 = vector.shape_cast %7 : vector<1x1x2x128xf32> to vector<1x2x128xf32>
    %c1_7 = arith.constant 1 : index
    %9 = memref.load %arg3[%c1_7] : memref<4xf32, #tpu.memory_space<smem>>
    %10 = vector.broadcast %9 : f32 to vector<1x2x128xf32>
    %11 = arith.mulf %8, %10 : vector<1x2x128xf32>
    %12 = arith.addf %6, %11 : vector<1x2x128xf32>
    %c0_8 = arith.constant 0 : index
    %c2 = arith.constant 2 : index
    %c0_9 = arith.constant 0 : index
    %c0_10 = arith.constant 0 : index
    %13 = vector.load %arg2[%c0_8, %c2, %c0_9, %c0_10] : memref<1x4x2x128xf32, #tpu.memory_space<vmem>>, vector<1x1x2x128xf32>
    %14 = vector.shape_cast %13 : vector<1x1x2x128xf32> to vector<1x2x128xf32>
    %c2_11 = arith.constant 2 : index
    %15 = memref.load %arg3[%c2_11] : memref<4xf32, #tpu.memory_space<smem>>
    %16 = vector.broadcast %15 : f32 to vector<1x2x128xf32>
    %17 = arith.mulf %14, %16 : vector<1x2x128xf32>
    %18 = arith.addf %12, %17 : vector<1x2x128xf32>
    %c0_12 = arith.constant 0 : index
    %c3 = arith.constant 3 : index
    %c0_13 = arith.constant 0 : index
    %c0_14 = arith.constant 0 : index
    %19 = vector.load %arg2[%c0_12, %c3, %c0_13, %c0_14] : memref<1x4x2x128xf32, #tpu.memory_space<vmem>>, vector<1x1x2x128xf32>
    %20 = vector.shape_cast %19 : vector<1x1x2x128xf32> to vector<1x2x128xf32>
    %c3_15 = arith.constant 3 : index
    %21 = memref.load %arg3[%c3_15] : memref<4xf32, #tpu.memory_space<smem>>
    %22 = vector.broadcast %21 : f32 to vector<1x2x128xf32>
    %23 = arith.mulf %20, %22 : vector<1x2x128xf32>
    %24 = arith.addf %18, %23 : vector<1x2x128xf32>
    %c0_16 = arith.constant 0 : index
    %25 = memref.load %arg4[%c0_16] : memref<1xf32, #tpu.memory_space<smem>>
    %26 = vector.broadcast %25 : f32 to vector<1x2x128xf32>
    %27 = arith.addf %24, %26 : vector<1x2x128xf32>
    %cst_17 = arith.constant 0.000000e+00 : f32
    %28 = vector.broadcast %cst_17 : f32 to vector<1x2x128xf32>
    %29 = arith.subf %28, %27 : vector<1x2x128xf32>
    %cst_18 = arith.constant 0.000000e+00 : f32
    %30 = vector.broadcast %cst_18 : f32 to vector<1x2x128xf32>
    %31 = arith.maximumf %29, %30 : vector<1x2x128xf32>
    %32 = math.absf %29 : vector<1x2x128xf32>
    %cst_19 = arith.constant 0.000000e+00 : f32
    %33 = vector.broadcast %cst_19 : f32 to vector<1x2x128xf32>
    %34 = arith.subf %33, %32 : vector<1x2x128xf32>
    %35 = math.exp %34 : vector<1x2x128xf32>
    %cst_20 = arith.constant 1.000000e+00 : f32
    %36 = vector.broadcast %cst_20 : f32 to vector<1x2x128xf32>
    %37 = arith.addf %36, %35 : vector<1x2x128xf32>
    %38 = math.log %37 : vector<1x2x128xf32>
    %39 = arith.addf %31, %38 : vector<1x2x128xf32>
    %cst_21 = arith.constant 0.000000e+00 : f32
    %40 = vector.broadcast %cst_21 : f32 to vector<1x2x128xf32>
    %41 = arith.subf %40, %39 : vector<1x2x128xf32>
    %c0_22 = arith.constant 0 : index
    %c0_23 = arith.constant 0 : index
    %42 = vector.load %arg5[%c0_22, %c0_23] : memref<128x128xf32, #tpu.memory_space<vmem>>, vector<128x128xf32>
    %43 = vector.shape_cast %41 : vector<1x2x128xf32> to vector<2x128xf32>
    %44 = arith.mulf %43, %43 : vector<2x128xf32>
    %cst_24 = arith.constant dense<0.000000e+00> : vector<2x128xf32>
    %45 = tpu.matmul %44, %42, %cst_24 {dimension_numbers = #tpu.dot_dimension_numbers<[1], [0], [0], [1], [0, 0, 1, 1], [], []>} : vector<2x128xf32>, vector<128x128xf32>, vector<2x128xf32> -> vector<2x128xf32>
    %cst_25 = arith.constant 1.000000e-24 : f32
    %46 = vector.broadcast %cst_25 : f32 to vector<2x128xf32>
    %47 = arith.maximumf %45, %46 : vector<2x128xf32>
    %48 = math.rsqrt %47 : vector<2x128xf32>
    %49 = arith.mulf %43, %48 : vector<2x128xf32>
    %cst_26 = arith.constant 1.000000e+00 : f32
    %50 = vector.broadcast %cst_26 : f32 to vector<2x128xf32>
    %51 = arith.addf %50, %49 : vector<2x128xf32>
    %c0_27 = arith.constant 0 : index
    %c0_28 = arith.constant 0 : index
    %c0_29 = arith.constant 0 : index
    %c0_30 = arith.constant 0 : index
    %52 = vector.load %arg2[%c0_27, %c0_28, %c0_29, %c0_30] : memref<1x4x2x128xf32, #tpu.memory_space<vmem>>, vector<1x1x2x128xf32>
    %53 = vector.shape_cast %52 : vector<1x1x2x128xf32> to vector<2x128xf32>
    %54 = arith.mulf %53, %51 : vector<2x128xf32>
    %c0_31 = arith.constant 0 : index
    %c0_32 = arith.constant 0 : index
    %c0_33 = arith.constant 0 : index
    %c0_34 = arith.constant 0 : index
    %55 = vector.load %arg6[%c0_31, %c0_32, %c0_33, %c0_34] : memref<1x4x2x128xf32, #tpu.memory_space<vmem>>, vector<1x1x2x128xf32>
    %56 = vector.shape_cast %55 : vector<1x1x2x128xf32> to vector<2x128xf32>
    %57 = vector.shape_cast %54 : vector<2x128xf32> to vector<1x1x2x128xf32>
    tpu.vector_store %arg6[%c0_31, %c0_32, %c0_33, %c0_34], %57 {strides = array<i32>} : memref<1x4x2x128xf32, #tpu.memory_space<vmem>>, vector<1x1x2x128xf32>,
    %c0_35 = arith.constant 0 : index
    %c1_36 = arith.constant 1 : index
    %c0_37 = arith.constant 0 : index
    %c0_38 = arith.constant 0 : index
    %58 = vector.load %arg2[%c0_35, %c1_36, %c0_37, %c0_38] : memref<1x4x2x128xf32, #tpu.memory_space<vmem>>, vector<1x1x2x128xf32>
    %59 = vector.shape_cast %58 : vector<1x1x2x128xf32> to vector<2x128xf32>
    %60 = arith.mulf %59, %51 : vector<2x128xf32>
    %c0_39 = arith.constant 0 : index
    %c1_40 = arith.constant 1 : index
    %c0_41 = arith.constant 0 : index
    %c0_42 = arith.constant 0 : index
    %61 = vector.load %arg6[%c0_39, %c1_40, %c0_41, %c0_42] : memref<1x4x2x128xf32, #tpu.memory_space<vmem>>, vector<1x1x2x128xf32>
    %62 = vector.shape_cast %61 : vector<1x1x2x128xf32> to vector<2x128xf32>
    %63 = vector.shape_cast %60 : vector<2x128xf32> to vector<1x1x2x128xf32>
    tpu.vector_store %arg6[%c0_39, %c1_40, %c0_41, %c0_42], %63 {strides = array<i32>} : memref<1x4x2x128xf32, #tpu.memory_space<vmem>>, vector<1x1x2x128xf32>,
    %c0_43 = arith.constant 0 : index
    %c2_44 = arith.constant 2 : index
    %c0_45 = arith.constant 0 : index
    %c0_46 = arith.constant 0 : index
    %64 = vector.load %arg2[%c0_43, %c2_44, %c0_45, %c0_46] : memref<1x4x2x128xf32, #tpu.memory_space<vmem>>, vector<1x1x2x128xf32>
    %65 = vector.shape_cast %64 : vector<1x1x2x128xf32> to vector<2x128xf32>
    %66 = arith.mulf %65, %51 : vector<2x128xf32>
    %c0_47 = arith.constant 0 : index
    %c2_48 = arith.constant 2 : index
    %c0_49 = arith.constant 0 : index
    %c0_50 = arith.constant 0 : index
    %67 = vector.load %arg6[%c0_47, %c2_48, %c0_49, %c0_50] : memref<1x4x2x128xf32, #tpu.memory_space<vmem>>, vector<1x1x2x128xf32>
    %68 = vector.shape_cast %67 : vector<1x1x2x128xf32> to vector<2x128xf32>
    %69 = vector.shape_cast %66 : vector<2x128xf32> to vector<1x1x2x128xf32>
    tpu.vector_store %arg6[%c0_47, %c2_48, %c0_49, %c0_50], %69 {strides = array<i32>} : memref<1x4x2x128xf32, #tpu.memory_space<vmem>>, vector<1x1x2x128xf32>,
    %c0_51 = arith.constant 0 : index
    %c3_52 = arith.constant 3 : index
    %c0_53 = arith.constant 0 : index
    %c0_54 = arith.constant 0 : index
    %70 = vector.load %arg2[%c0_51, %c3_52, %c0_53, %c0_54] : memref<1x4x2x128xf32, #tpu.memory_space<vmem>>, vector<1x1x2x128xf32>
    %71 = vector.shape_cast %70 : vector<1x1x2x128xf32> to vector<2x128xf32>
    %72 = arith.mulf %71, %51 : vector<2x128xf32>
    %c0_55 = arith.constant 0 : index
    %c3_56 = arith.constant 3 : index
    %c0_57 = arith.constant 0 : index
    %c0_58 = arith.constant 0 : index
    %73 = vector.load %arg6[%c0_55, %c3_56, %c0_57, %c0_58] : memref<1x4x2x128xf32, #tpu.memory_space<vmem>>, vector<1x1x2x128xf32>
    %74 = vector.shape_cast %73 : vector<1x1x2x128xf32> to vector<2x128xf32>
    %75 = vector.shape_cast %72 : vector<2x128xf32> to vector<1x1x2x128xf32>
    tpu.vector_store %arg6[%c0_55, %c3_56, %c0_57, %c0_58], %75 {strides = array<i32>} : memref<1x4x2x128xf32, #tpu.memory_space<vmem>>, vector<1x1x2x128xf32>,
    return
  }
  func.func @transform_0(%arg0: i32, %arg1: i32) -> (i32, i32, i32, i32) {
    %c0_i32 = arith.constant 0 : i32
    %c0_i32_0 = arith.constant 0 : i32
    %c0_i32_1 = arith.constant 0 : i32
    return %arg0, %c0_i32, %arg1, %c0_i32_0 : i32, i32, i32, i32
  }
  func.func @transform_1(%arg0: i32, %arg1: i32) -> i32 {
    %c0_i32 = arith.constant 0 : i32
    %c0_i32_0 = arith.constant 0 : i32
    return %c0_i32 : i32
  }
  func.func @transform_2(%arg0: i32, %arg1: i32) -> i32 {
    %c0_i32 = arith.constant 0 : i32
    %c0_i32_0 = arith.constant 0 : i32
    return %c0_i32 : i32
  }
  func.func @transform_3(%arg0: i32, %arg1: i32) -> (i32, i32) {
    %c0_i32 = arith.constant 0 : i32
    %c0_i32_0 = arith.constant 0 : i32
    %c0_i32_1 = arith.constant 0 : i32
    return %c0_i32, %c0_i32_0 : i32, i32
  }
  func.func @transform_4(%arg0: i32, %arg1: i32) -> (i32, i32, i32, i32) {
    %c0_i32 = arith.constant 0 : i32
    %c0_i32_0 = arith.constant 0 : i32
    %c0_i32_1 = arith.constant 0 : i32
    return %arg0, %c0_i32, %arg1, %c0_i32_0 : i32, i32, i32, i32
  }
}

</mosaic_0001>

<llo_original>
// kernel: tpu_custom_call.1
$region0: #{tpu_custom_call.1}
  #allocation0 [shape = 'u32[]', space=smem, size = 0x4, offset = 0x4, fixed_abs, tag = 'smem constant byte address 0x4 - core index']
  #allocation1 [shape = 'u32[144,128]{1,0:T(1,128)}', space=vmem, size = 0x12000, scoped, tag = 'internal scratch']
  #allocation2 [shape = 'f32[1]{0:T(128)S(6)}', space=smem, size = 0x200, scoped, tag = 'scoped memory for tpu_custom_call.1']
  %s0 = inlined_call_operand.hbm [shape: f32[2,4,2,128], index: 0, kind: input, shape index: {}]
  %s1 = inlined_call_operand.vmem [shape: f32[4], index: 1, kind: input, shape index: {}]
  %s2 = inlined_call_operand.<no memory space> [shape: f32[1], index: 2, kind: input, shape index: {}]
  %s3 = inlined_call_operand.hbm [shape: f32[128,128], index: 3, kind: input, shape index: {}]
  %s4 = inlined_call_operand.hbm [shape: f32[2,4,2,128], index: 4, kind: output, shape index: {}]
  %s5 = sld [smem:[#allocation0]]
  $region61: #{tpu_custom_call.1} parent=0
    _
  %s7 = ssub.s32 1, %s5
  %s8 = scalar_select 0, %s7, %s5
  %9 = sst [smem:[#allocation2]] %s2
  $region1: #{tpu_custom_call.1} parent=0
    #allocation3 [shape = 'u8[8192]{0}', space=vmem, size = 0x2000, scoped, tag = 'input window, operand 0']
    #allocation4 [shape = 's32[2]{0}', space=sflag, size = 0x8, scoped, tag = 'scoped memory for tpu_custom_call.1']
    #allocation5 [shape = 's32[2]{0}', space=sflag, size = 0x8, scoped, tag = 'scoped memory for tpu_custom_call.1']
    #allocation6 [shape = 's32[2]{0}', space=sflag, size = 0x8, scoped, tag = 'scoped memory for tpu_custom_call.1']
    #allocation7 [shape = 'u8[512]{0}', space=smem, size = 0x200, scoped, tag = 'input window, operand 1, single buffered']
    #allocation8 [shape = 'u8[65536]{0}', space=vmem, size = 0x10000, scoped, tag = 'input window, operand 3, single buffered']
    #allocation9 [shape = 's32[1]{0}', space=sflag, size = 0x4, scoped, tag = 'scoped memory for tpu_custom_call.1']
    #allocation10 [shape = 'u8[8192]{0}', space=vmem, size = 0x2000, scoped, tag = 'output window, operand 0']
    %10 = vsyncpa [#allocation4], 0
    %s11 = scalar_lea.sflag [#allocation4], 1
    %12 = vsyncpa %s11, 0
    %13 = vsyncpa [#allocation6], 0
    %14 = vsyncpa [#allocation9], 0
    %15 = vsyncpa [#allocation5], 0
    %s16 = scalar_lea.sflag [#allocation5], 1
    %17 = vsyncpa %s16, 0
    loop: start=0, step=1, limit=4
    $region2: #{tpu_custom_call.1} parent=1 // loop_pre_header
      _
    $region3: #{tpu_custom_call.1} parent=1 // loop_header
      %s19 = sphi 0, %s23
      %p20 = scmp.ge.s32.totalorder %s19, 4
      %s26 = sphi 0, %s38
      %s27 = sphi 0, %s34
      %s28 = sphi 0, %s26
      %s29 = sphi 0, %s27
      %s30 = sphi 0, %s28
      %s31 = sphi 0, %s29
      %s43 = sphi 0, %s45
      %s46 = sphi 0, %s43
      %s47 = sphi 0, %s46
      %s63 = sphi 0, %s47
      %s67 = sphi 0, %s67
      %s69 = sphi 0, %s67
      %s70 = sphi 0, %s69
      %s84 = sphi 0, %s70
      %s88 = sphi 0, %s88
      %s90 = sphi 0, %s88
      %s91 = sphi 0, %s90
      %s105 = sphi 0, %s91
      %s109 = sphi 0, %s109
      %s111 = sphi 0, %s109
      %s112 = sphi 0, %s111
      %s126 = sphi 0, %s112
      %s134 = sphi 0, %s136
      %s137 = sphi 0, %s134
      %s138 = sphi 0, %s137
      %s154 = sphi 0, %s138
    $region4: #{tpu_custom_call.1} parent=1 // loop_header_branch
      %22 = sbr.rel (%p20) target = $region8
    $region5: #{tpu_custom_call.1} parent=1 // loop_body
      %s24 = ssub.s32 %s19, 1
      %s25 = ssub.s32 %s19, 2
      %s32 = sadd.s32 1, %s27
      %p33 = scmp.ge.s32.totalorder %s32, 1
      %s34 = scalar_select %p33, 0, %s32
      %s35 = sadd.s32 1, %s26
      %s36 = scalar_select %p33, %s35, %s26
      %p37 = scmp.ge.s32.totalorder %s36, 2
      %s38 = scalar_select %p37, 0, %s36
      %s39 = ssub.s32 %s26, %s38
      %s40 = ssub.s32 %s27, %s34
      %s41 = sor.u32 %s39, %s40
      %p42 = scmp.eq.s32.totalorder %s41, 0
      %s44 = sadd.s32 %s43, 1
      %s45 = scalar_select %p42, %s43, %s44
      %p48 = pneg %p42
      %p49 = scmp.eq.s32.totalorder %s19, 1
      %p50 = por %p48, %p49
      %p51 = scmp.ne.s32.totalorder %s43, %s46
      %p52 = scmp.eq.s32.totalorder %s19, 0
      %p53 = por %p51, %p52
      %p54 = scmp.ne.s32.totalorder %s43, %s46
      %p55 = scmp.eq.s32.totalorder %s24, 1
      %p56 = por %p54, %p55
      %p57 = scmp.ne.s32.totalorder %s46, %s47
      %p58 = scmp.eq.s32.totalorder %s24, 0
      %p59 = por %p57, %p58
      %p60 = scmp.ne.s32.totalorder %s46, %s47
      %p61 = scmp.eq.s32.totalorder %s25, 1
      %p62 = por %p60, %p61
      %p64 = scmp.ne.s32.totalorder %s47, %s63
      %p65 = scmp.eq.s32.totalorder %s25, 0
      %p66 = por %p64, %p65
      %s68 = sadd.s32 %s67, 1
      %p71 = scmp.eq.s32.totalorder %s19, 1
      %p72 = scmp.ne.s32.totalorder %s67, %s69
      %p73 = scmp.eq.s32.totalorder %s19, 0
      %p74 = por %p72, %p73
      %p75 = scmp.ne.s32.totalorder %s67, %s69
      %p76 = scmp.eq.s32.totalorder %s24, 1
      %p77 = por %p75, %p76
      %p78 = scmp.ne.s32.totalorder %s69, %s70
      %p79 = scmp.eq.s32.totalorder %s24, 0
      %p80 = por %p78, %p79
      %p81 = scmp.ne.s32.totalorder %s69, %s70
      %p82 = scmp.eq.s32.totalorder %s25, 1
      %p83 = por %p81, %p82
      %p85 = scmp.ne.s32.totalorder %s70, %s84
      %p86 = scmp.eq.s32.totalorder %s25, 0
      %p87 = por %p85, %p86
      %s89 = sadd.s32 %s88, 1
      %p92 = scmp.eq.s32.totalorder %s19, 1
      %p93 = scmp.ne.s32.totalorder %s88, %s90
      %p94 = scmp.eq.s32.totalorder %s19, 0
      %p95 = por %p93, %p94
      %p96 = scmp.ne.s32.totalorder %s88, %s90
      %p97 = scmp.eq.s32.totalorder %s24, 1
      %p98 = por %p96, %p97
      %p99 = scmp.ne.s32.totalorder %s90, %s91
      %p100 = scmp.eq.s32.totalorder %s24, 0
      %p101 = por %p99, %p100
      %p102 = scmp.ne.s32.totalorder %s90, %s91
      %p103 = scmp.eq.s32.totalorder %s25, 1
      %p104 = por %p102, %p103
      %p106 = scmp.ne.s32.totalorder %s91, %s105
      %p107 = scmp.eq.s32.totalorder %s25, 0
      %p108 = por %p106, %p107
      %s110 = sadd.s32 %s109, 1
      %p113 = scmp.eq.s32.totalorder %s19, 1
      %p114 = scmp.ne.s32.totalorder %s109, %s111
      %p115 = scmp.eq.s32.totalorder %s19, 0
      %p116 = por %p114, %p115
      %p117 = scmp.ne.s32.totalorder %s109, %s111
      %p118 = scmp.eq.s32.totalorder %s24, 1
      %p119 = por %p117, %p118
      %p120 = scmp.ne.s32.totalorder %s111, %s112
      %p121 = scmp.eq.s32.totalorder %s24, 0
      %p122 = por %p120, %p121
      %p123 = scmp.ne.s32.totalorder %s111, %s112
      %p124 = scmp.eq.s32.totalorder %s25, 1
      %p125 = por %p123, %p124
      %p127 = scmp.ne.s32.totalorder %s112, %s126
      %p128 = scmp.eq.s32.totalorder %s25, 0
      %p129 = por %p127, %p128
      %s130 = ssub.s32 %s26, %s38
      %s131 = ssub.s32 %s27, %s34
      %s132 = sor.u32 %s130, %s131
      %p133 = scmp.eq.s32.totalorder %s132, 0
      %s135 = sadd.s32 %s134, 1
      %s136 = scalar_select %p133, %s134, %s135
      %p139 = pneg %p133
      %p140 = scmp.eq.s32.totalorder %s19, 1
      %p141 = por %p139, %p140
      %p142 = scmp.ne.s32.totalorder %s134, %s137
      %p143 = scmp.eq.s32.totalorder %s19, 0
      %p144 = por %p142, %p143
      %p145 = scmp.ne.s32.totalorder %s134, %s137
      %p146 = scmp.eq.s32.totalorder %s24, 1
      %p147 = por %p145, %p146
      %p148 = scmp.ne.s32.totalorder %s137, %s138
      %p149 = scmp.eq.s32.totalorder %s24, 0
      %p150 = por %p148, %p149
      %p151 = scmp.ne.s32.totalorder %s137, %s138
      %p152 = scmp.eq.s32.totalorder %s25, 1
      %p153 = por %p151, %p152
      %p155 = scmp.ne.s32.totalorder %s138, %s154
      %p156 = scmp.eq.s32.totalorder %s25, 0
      %p157 = por %p155, %p156
      %p158 = scmp.le.s32.totalorder 1, %s19
      %p159 = scmp.lt.s32.totalorder %s19, 3
      %p160 = pnand %p158, %p159
      %p161 = pneg %p160
      // Predicated region
      $region9: #{tpu_custom_call.1} parent=5 // pred_check
        _
      $region10: #{tpu_custom_call.1} parent=5 // pred_check_branch
        %163 = sbr.rel (%p160) target = $region12
      $region11: #{tpu_custom_call.1} parent=5 // pred_region
        %s164 = ssub.s32 %s19, 1
        // Predicated region
        $region13: #{tpu_custom_call.1} parent=11 // pred_check
          %p165 = pneg %p80
        $region14: #{tpu_custom_call.1} parent=11 // pred_check_branch
          %167 = sbr.rel (%p165) target = $region16
        $region15: #{tpu_custom_call.1} parent=11 // pred_region
          %s169 = ssub.s32 16, 16
          %170 = vsyncadd [#allocation6], %s169
          %s172 = sshll.u32 %s1, 4
          %s173 = int_to_ptr.vmem [resolvable:$true] %s172
          %175 = dma.vmem_to_smem %s173, 16, [#allocation7], [#allocation6]
        $region16: #{tpu_custom_call.1} parent=11 // pred_fallthru
          _
        // Predicated region
        $region17: #{tpu_custom_call.1} parent=11 // pred_check
          %p176 = pneg %p101
        $region18: #{tpu_custom_call.1} parent=11 // pred_check_branch
          %178 = sbr.rel (%p176) target = $region20
        $region19: #{tpu_custom_call.1} parent=11 // pred_region
          _
        $region20: #{tpu_custom_call.1} parent=11 // pred_fallthru
          _
        // Predicated region
        $region21: #{tpu_custom_call.1} parent=11 // pred_check
          %p179 = pneg %p122
        $region22: #{tpu_custom_call.1} parent=11 // pred_check_branch
          %181 = sbr.rel (%p179) target = $region24
        $region23: #{tpu_custom_call.1} parent=11 // pred_region
          %s183 = ssub.s32 2048, 2048
          %184 = vsyncadd [#allocation9], %s183
          %s185 = sshll.u32 [#allocation8], 4
          %s186 = int_to_ptr.vmem [resolvable:$true] %s185
          %191 = dma.hbm_to_vmem [thread:$0]  %s3, 2048, %s186, [#allocation9], 128, 128, 8
        $region24: #{tpu_custom_call.1} parent=11 // pred_fallthru
          _
      $region12: #{tpu_custom_call.1} parent=5 // pred_fallthru
        _
      %p192 = scmp.lt.s32.totalorder %s19, 2
      // Predicated region
      $region25: #{tpu_custom_call.1} parent=5 // pred_check
        %p193 = pneg %p192
      $region26: #{tpu_custom_call.1} parent=5 // pred_check_branch
        %195 = sbr.rel (%p193) target = $region28
      $region27: #{tpu_custom_call.1} parent=5 // pred_region
        // Predicated region
        $region29: #{tpu_custom_call.1} parent=27 // pred_check
          %p196 = pneg %p53
        $region30: #{tpu_custom_call.1} parent=27 // pred_check_branch
          %198 = sbr.rel (%p196) target = $region32
        $region31: #{tpu_custom_call.1} parent=27 // pred_region
          %s199 = sand.u32 %s43, 1
          %s200 = scalar_lea.sflag [#allocation4], %s199
          %s201 = sand.u32 %s43, 1
          %s202 = smul.addr %s201, 8
          %s203 = scalar_lea.vmem [#allocation3], %s202
          %s205 = ssub.s32 128, 128
          %206 = vsyncadd %s200, %s205
          %s207 = smul.addr %s26, 4
          %s208 = sadd.s32 %s27, %s207
          %s209 = smul.addr %s208, 32
          %s210 = scalar_lea.hbm %s0, %s209
          %s211 = sshll.u32 %s203, 4
          %s212 = int_to_ptr.vmem [resolvable:$true] %s211
          %217 = dma.hbm_to_vmem [thread:$0]  %s210, 128, %s212, %s200, 32, 32, 2
        $region32: #{tpu_custom_call.1} parent=27 // pred_fallthru
          _
      $region28: #{tpu_custom_call.1} parent=5 // pred_fallthru
        _
      %p218 = scmp.le.s32.totalorder 1, %s19
      %p219 = scmp.lt.s32.totalorder %s19, 3
      %p220 = pnand %p218, %p219
      %p221 = pneg %p220
      // Predicated region
      $region33: #{tpu_custom_call.1} parent=5 // pred_check
        _
      $region34: #{tpu_custom_call.1} parent=5 // pred_check_branch
        %223 = sbr.rel (%p220) target = $region36
      $region35: #{tpu_custom_call.1} parent=5 // pred_region
        %s224 = ssub.s32 %s19, 1
        %s225 = sand.u32 %s46, 1
        %s226 = scalar_lea.sflag [#allocation4], %s225
        %s227 = sand.u32 %s46, 1
        %s228 = smul.addr %s227, 8
        %s229 = scalar_lea.vmem [#allocation3], %s228
        // Predicated region
        $region37: #{tpu_custom_call.1} parent=35 // pred_check
          %p230 = pneg %p59
        $region38: #{tpu_custom_call.1} parent=35 // pred_check_branch
          %232 = sbr.rel (%p230) target = $region40
        $region39: #{tpu_custom_call.1} parent=35 // pred_region
          %233 = dma.done %s226, 128
        $region40: #{tpu_custom_call.1} parent=35 // pred_fallthru
          _
        // Predicated region
        $region41: #{tpu_custom_call.1} parent=35 // pred_check
          %p234 = pneg %p80
        $region42: #{tpu_custom_call.1} parent=35 // pred_check_branch
          %236 = sbr.rel (%p234) target = $region44
        $region43: #{tpu_custom_call.1} parent=35 // pred_region
          %237 = dma.done [#allocation6], 16
        $region44: #{tpu_custom_call.1} parent=35 // pred_fallthru
          _
        // Predicated region
        $region45: #{tpu_custom_call.1} parent=35 // pred_check
          %p238 = pneg %p122
        $region46: #{tpu_custom_call.1} parent=35 // pred_check_branch
          %240 = sbr.rel (%p238) target = $region48
        $region47: #{tpu_custom_call.1} parent=35 // pred_region
          %241 = dma.done [#allocation9], 2048
        $region48: #{tpu_custom_call.1} parent=35 // pred_fallthru
          _
        %242 = sfence
        %s243 = sand.u32 %s46, 1
        %s244 = scalar_lea.sflag [#allocation4], %s243
        %s245 = sand.u32 %s46, 1
        %s246 = smul.addr %s245, 8
        %s247 = scalar_lea.vmem [#allocation3], %s246
        %p248 = pneg %p59
        %p249 = pneg %p56
        %p250 = pneg %p80
        %p251 = pneg %p77
        %p252 = pneg %p101
        %p253 = pneg %p98
        %p254 = pneg %p122
        %p255 = pneg %p119
        %p256 = pneg %p150
        %p257 = pneg %p147
        %s258 = sand.u32 %s137, 1
        %s259 = scalar_lea.sflag [#allocation5], %s258
        %s260 = sand.u32 %s137, 1
        %s261 = smul.addr %s260, 8
        %s262 = scalar_lea.vmem [#allocation10], %s261
        %v263 = vld [vmem:[%s229] sm:$0x3]
        %s264 = sld [smem:[#allocation7]]
        %v265 = vstv %s264
        %v266 = vmul.f32 %v263, %v265
        %v267 = vadd.f32 %v266, 0.0
        %s268 = scalar_lea.vmem %s229, 2 [#allocation3]
        %v269 = vld [vmem:[%s268] sm:$0x3]
        %s270 = sld [smem:[#allocation7 + $0x1]]
        %v271 = vstv %s270
        %v272 = vmul.f32 %v269, %v271
        %v273 = vadd.f32 %v267, %v272
        %s274 = scalar_lea.vmem %s229, 4 [#allocation3]
        %v275 = vld [vmem:[%s274] sm:$0x3]
        %s276 = sld [smem:[#allocation7 + $0x2]]
        %v277 = vstv %s276
        %v278 = vmul.f32 %v275, %v277
        %v279 = vadd.f32 %v273, %v278
        %s280 = scalar_lea.vmem %s229, 6 [#allocation3]
        %v281 = vld [vmem:[%s280] sm:$0x3]
        %s282 = sld [smem:[#allocation7 + $0x3]]
        %v283 = vstv %s282
        %v284 = vmul.f32 %v281, %v283
        %v285 = vadd.f32 %v279, %v284
        %s286 = sld [smem:[#allocation2]]
        %v287 = vstv %s286
        %v288 = vadd.f32 %v285, %v287
        %v289 = vsub.f32 0.0, %v288
        %v290 = vmax.f32 %v289, 0.0
        %v291 = vand.u32 2147483647, %v289
        %v292 = vsub.f32 0.0, %v291
        %v293 = vmul.f32 %v292, 1.442695
        %v294 = vpow.pop %v293
        %v295 = vadd.f32 %v294, 1.0
        %v296 = vlog2.pop %v295
        %v297 = vmul.f32 %v296, 0.6931472
        %v298 = vadd.f32 %v290, %v297
        %v299 = vsub.f32 0.0, %v298
        %v300 = vld [vmem:[#allocation8] sm:$0xff]
        %v301 = vld [vmem:[#allocation8 + $0x8] sm:$0xff]
        %v302 = vld [vmem:[#allocation8 + $0x10] sm:$0xff]
        %v303 = vld [vmem:[#allocation8 + $0x18] sm:$0xff]
        %v304 = vld [vmem:[#allocation8 + $0x20] sm:$0xff]
        %v305 = vld [vmem:[#allocation8 + $0x28] sm:$0xff]
        %v306 = vld [vmem:[#allocation8 + $0x30] sm:$0xff]
        %v307 = vld [vmem:[#allocation8 + $0x38] sm:$0xff]
        %v308 = vld [vmem:[#allocation8 + $0x40] sm:$0xff]
        %v309 = vld [vmem:[#allocation8 + $0x48] sm:$0xff]
        %v310 = vld [vmem:[#allocation8 + $0x50] sm:$0xff]
        %v311 = vld [vmem:[#allocation8 + $0x58] sm:$0xff]
        %v312 = vld [vmem:[#allocation8 + $0x60] sm:$0xff]
        %v313 = vld [vmem:[#allocation8 + $0x68] sm:$0xff]
        %v314 = vld [vmem:[#allocation8 + $0x70] sm:$0xff]
        %v315 = vld [vmem:[#allocation8 + $0x78] sm:$0xff]
        %v316 = vmul.f32 %v299, %v299
        %317 = vmatprep.subr.mxu0 0.0
        %318 = vmatpush1.msra.mxu0 %v315
        %319 = vmatprep.subr.mxu0 0.0
        %320 = vmatpush1.msra.mxu0 %v314
        %321 = vmatprep.subr.mxu0 0.0
        %322 = vmatpush1.msra.mxu0 %v313
        %323 = vmatprep.subr.mxu0 0.0
        %324 = vmatpush1.msra.mxu0 %v312
        %325 = vmatprep.subr.mxu0 0.0
        %326 = vmatpush1.msra.mxu0 %v311
        %327 = vmatprep.subr.mxu0 0.0
        %328 = vmatpush1.msra.mxu0 %v310
        %329 = vmatprep.subr.mxu0 0.0
        %330 = vmatpush1.msra.mxu0 %v309
        %331 = vmatprep.subr.mxu0 0.0
        %332 = vmatpush1.msra.mxu0 %v308
        %333 = vmatprep.subr.mxu0 0.0
        %334 = vmatpush1.msra.mxu0 %v307
        %335 = vmatprep.subr.mxu0 0.0
        %336 = vmatpush1.msra.mxu0 %v306
        %337 = vmatprep.subr.mxu0 0.0
        %338 = vmatpush1.msra.mxu0 %v305
        %339 = vmatprep.subr.mxu0 0.0
        %340 = vmatpush1.msra.mxu0 %v304
        %341 = vmatprep.subr.mxu0 0.0
        %342 = vmatpush1.msra.mxu0 %v303
        %343 = vmatprep.subr.mxu0 0.0
        %344 = vmatpush1.msra.mxu0 %v302
        %345 = vmatprep.subr.mxu0 0.0
        %346 = vmatpush1.msra.mxu0 %v301
        %347 = vmatprep.subr.mxu0 0.0
        %348 = vmatpush1.msra.mxu0 %v300
        %349 = vmatprep.subr.mxu0 0.0
        %350 = vmatpush2.msra.mxu0 0.0
        %351 = vmatprep.subr.mxu0 0.0
        %352 = vmatpush2.msra.mxu0 0.0
        %353 = vmatprep.subr.mxu0 0.0
        %354 = vmatpush2.msra.mxu0 0.0
        %355 = vmatprep.subr.mxu0 0.0
        %356 = vmatpush2.msra.mxu0 0.0
        %357 = vmatprep.subr.mxu0 0.0
        %358 = vmatpush2.msra.mxu0 0.0
        %359 = vmatprep.subr.mxu0 0.0
        %360 = vmatpush2.msra.mxu0 0.0
        %361 = vmatprep.subr.mxu0 0.0
        %362 = vmatpush2.msra.mxu0 0.0
        %363 = vmatprep.subr.mxu0 0.0
        %364 = vmatpush2.msra.mxu0 0.0
        %365 = vmatprep.subr.mxu0 0.0
        %366 = vmatpush2.msra.mxu0 0.0
        %367 = vmatprep.subr.mxu0 0.0
        %368 = vmatpush2.msra.mxu0 0.0
        %369 = vmatprep.subr.mxu0 0.0
        %370 = vmatpush2.msra.mxu0 0.0
        %371 = vmatprep.subr.mxu0 0.0
        %372 = vmatpush2.msra.mxu0 0.0
        %373 = vmatprep.subr.mxu0 0.0
        %374 = vmatpush2.msra.mxu0 0.0
        %375 = vmatprep.subr.mxu0 0.0
        %376 = vmatpush2.msra.mxu0 0.0
        %377 = vmatprep.subr.mxu0 0.0
        %378 = vmatpush2.msra.mxu0 0.0
        %379 = vmatprep.subr.mxu0 0.0
        %380 = vmatpush2.msra.mxu0 0.0
        %381 = vmatprep.mubr.f32.mxu0 0.0
        %382 = vmatmul.mubr.f32.gmra.mxu0 %v316
        %v383 = vpop.f32.mrf.mxu0
        %v384 = vadd.f32 0.0, %v383
        %v385 = vpop.f32.mrf.mxu0
        %386 = vdwg.mxu0
        %v387 = vmax.f32 %v384, 1e-24
        %v388 = vrsqrt.pop %v387
        %v389 = vmul.f32 %v299, %v388
        %v390 = vadd.f32 %v389, 1.0
        %v391 = vmul.f32 %v263, %v390
        %392 = vst [vmem:[%s262] sm:$0x3] %v391
        %v393 = vld [vmem:[%s268] sm:$0x3]
        %v394 = vmul.f32 %v393, %v390
        %s395 = scalar_lea.vmem %s262, 2 [#allocation10]
        %396 = vst [vmem:[%s395] sm:$0x3] %v394
        %v397 = vld [vmem:[%s274] sm:$0x3]
        %v398 = vmul.f32 %v397, %v390
        %s399 = scalar_lea.vmem %s262, 4 [#allocation10]
        %400 = vst [vmem:[%s399] sm:$0x3] %v398
        %v401 = vld [vmem:[%s280] sm:$0x3]
        %v402 = vmul.f32 %v401, %v390
        %s403 = scalar_lea.vmem %s262, 6 [#allocation10]
        %404 = vst [vmem:[%s403] sm:$0x3] %v402
        %s405 = sand.u32 %s137, 1
        %s406 = scalar_lea.sflag [#allocation5], %s405
        %s407 = sand.u32 %s137, 1
        %s408 = smul.addr %s407, 8
        %s409 = scalar_lea.vmem [#allocation10], %s408
        // Predicated region
        $region49: #{tpu_custom_call.1} parent=35 // pred_check
          %p410 = pneg %p147
        $region50: #{tpu_custom_call.1} parent=35 // pred_check_branch
          %412 = sbr.rel (%p410) target = $region52
        $region51: #{tpu_custom_call.1} parent=35 // pred_region
          %s414 = ssub.s32 128, 128
          %415 = vsyncadd %s406, %s414
          %s416 = smul.addr %s28, 4
          %s417 = sadd.s32 %s29, %s416
          %s418 = smul.addr %s417, 32
          %s419 = scalar_lea.hbm %s4, %s418
          %s420 = sshll.u32 %s409, 4
          %s421 = int_to_ptr.vmem [resolvable:$true] %s420
          %426 = dma.vmem_to_hbm [thread:$0]  %s421, 128, %s419, %s406, 32, 32, 2
        $region52: #{tpu_custom_call.1} parent=35 // pred_fallthru
          _
      $region36: #{tpu_custom_call.1} parent=5 // pred_fallthru
        _
      %p427 = scmp.le.s32.totalorder 2, %s19
      // Predicated region
      $region53: #{tpu_custom_call.1} parent=5 // pred_check
        %p428 = pneg %p427
      $region54: #{tpu_custom_call.1} parent=5 // pred_check_branch
        %430 = sbr.rel (%p428) target = $region56
      $region55: #{tpu_custom_call.1} parent=5 // pred_region
        %s431 = ssub.s32 %s19, 2
        // Predicated region
        $region57: #{tpu_custom_call.1} parent=55 // pred_check
          %p432 = pneg %p153
        $region58: #{tpu_custom_call.1} parent=55 // pred_check_branch
          %434 = sbr.rel (%p432) target = $region60
        $region59: #{tpu_custom_call.1} parent=55 // pred_region
          %s435 = sand.u32 %s138, 1
          %s436 = scalar_lea.sflag [#allocation5], %s435
          %s437 = sand.u32 %s138, 1
          %s438 = smul.addr %s437, 8
          %s439 = scalar_lea.vmem [#allocation10], %s438
          %440 = dma.done %s436, 128
        $region60: #{tpu_custom_call.1} parent=55 // pred_fallthru
          _
      $region56: #{tpu_custom_call.1} parent=5 // pred_fallthru
        _
    $region6: #{tpu_custom_call.1} parent=1 // loop_footer
      %s23 = sadd.s32 1, %s19
    $region7: #{tpu_custom_call.1} parent=1 // loop_footer_branch
      %18 = sbr.rel target = $region3
    $region8: #{tpu_custom_call.1} parent=1 // loop_exit
      _
    %441 = vsyncpa [#allocation4], 1
    %s442 = scalar_lea.sflag [#allocation4], 1
    %443 = vsyncpa %s442, 1
    %444 = vsyncpa [#allocation9], 1
    %445 = vsyncpa [#allocation5], 1
    %s446 = scalar_lea.sflag [#allocation5], 1
    %447 = vsyncpa %s446, 1
    %448 = vsyncpa [#allocation6], 1
    %s449 = scalar_lea.sflag [#allocation6], 1
    %450 = vsyncpa %s449, 1

</llo_original>
